<compile_context>
chip_gen: v7x
topology: tpu7x:2x2x1
jax: 0.10.0
libtpu: 0.0.40
codegen_flags: <defaults>
</compile_context>

<pallas_src>
import math
import functools

import jax
import jax.numpy as jnp
from jax.experimental import pallas as pl
from jax.experimental.pallas import tpu as pltpu

_LANE = 128
_SUBLANE = 8
_MAX_TILE_ROWS = 1024  # 1024 x 128 x 4B = 512 KiB per tile (double-buffered)


def _cdiv(a, b):
    return -(-a // b)


def _round_up(a, b):
    return _cdiv(a, b) * b


def _plan(x_elems):
    """Static grid plan driven by the (largest) x operand.

    Returns (nsplit, tile_x_rows, tiles_per_split)."""
    rows_x = max(1, _cdiv(x_elems, _LANE))
    # 2-way "parallel" split for v7x's two TensorCores; on single-core
    # v5e/v6e it is just a second serial pass of the same loop.
    nsplit = 2 if rows_x >= 2 * _SUBLANE else 1
    per_split = _cdiv(rows_x, nsplit)
    tile_x = min(_MAX_TILE_ROWS, _round_up(per_split, _SUBLANE))
    tiles_per_split = _cdiv(rows_x, nsplit * tile_x)
    return nsplit, tile_x, tiles_per_split


def _sec_tile_rows(elems, steps):
    """Tile height (multiple of 8) so a secondary operand spans `steps` tiles."""
    rows = max(1, _cdiv(elems, _LANE))
    return max(_SUBLANE, _round_up(_cdiv(rows, steps), _SUBLANE))


def _pad_to_slab(flat, rows):
    """Zero-pad a 1-D array to rows*128 elems and reshape lane-dense (rows, 128).

    Zero padding is neutral for sums and sums-of-squares."""
    need = rows * _LANE
    if flat.shape[0] != need:
        flat = jnp.zeros((need,), flat.dtype).at[: flat.shape[0]].set(flat)
    return flat.reshape(rows, _LANE)


def _loss_kernel(x_ref, ldj_ref, p_ref, nll_ref, reg_ref):
    """Fused streaming reduction.

    Per grid step accumulates (pure VPU, leading-axis reduce):
      nll_parts += 0.5 * sum(x^2) - sum(log_det_J)        (per (sublane, lane))
      reg_parts += sum(p^2)
    The (8,128) output blocks are indexed only by the parallel split axis, so
    they stay VMEM-resident across the inner reduction axis.
    """
    t = pl.program_id(1)

    @pl.when(t == 0)
    def _init():
        nll_ref[...] = jnp.zeros_like(nll_ref)
        reg_ref[...] = jnp.zeros_like(reg_ref)

    x = x_ref[...].astype(jnp.float32)
    ldj = ldj_ref[...].astype(jnp.float32)
    p = p_ref[...].astype(jnp.float32)

    nll_ref[...] += (
        0.5 * jnp.sum((x * x).reshape(-1, _SUBLANE, _LANE), axis=0)
        - jnp.sum(ldj.reshape(-1, _SUBLANE, _LANE), axis=0)
    )
    reg_ref[...] += jnp.sum((p * p).reshape(-1, _SUBLANE, _LANE), axis=0)


def pack_params(params):
    """Flatten + concat + pad the model parameters ONCE (setup time), so each
    loss call streams one contiguous lane-dense buffer with no per-call concat
    (and typically no per-call re-pad)."""
    flat = jnp.concatenate([jnp.ravel(p) for p in params])
    padded = _round_up(flat.shape[0], _SUBLANE * _LANE)
    if padded != flat.shape[0]:
        flat = jnp.zeros((padded,), flat.dtype).at[: flat.shape[0]].set(flat)
    return flat


@functools.partial(jax.jit, static_argnames=("lambda_1",))
def loss_forward(x, log_det_J, param_buf, lambda_1=0.001):
    """JAX/Pallas equivalent of Loss.forward(x, log_det_J, model, lambda_1).

    Args:
      x:          [N, D] array (any float dtype; upcast to f32 in-kernel)
      log_det_J:  [N]    array
      param_buf:  output of pack_params(list(model parameters))
      lambda_1:   regularization weight (static)
    Returns:
      (total_loss, nll) — two float32 scalars, matching the PyTorch tuple.
    """
    n = x.shape[0]

    nsplit, tile_x, tps = _plan(x.size)
    steps = nsplit * tps
    tile_l = _sec_tile_rows(log_det_J.size, steps)
    tile_p = _sec_tile_rows(param_buf.size, steps)

    x_slab = _pad_to_slab(x.reshape(-1), steps * tile_x)
    l_slab = _pad_to_slab(log_det_J.reshape(-1), steps * tile_l)
    p_slab = _pad_to_slab(param_buf.reshape(-1), steps * tile_p)

    in_bytes = sum(s.size * jnp.dtype(s.dtype).itemsize
                   for s in (x_slab, l_slab, p_slab))
    out_bytes = 2 * nsplit * _SUBLANE * _LANE * 4

    nll_parts, reg_parts = pl.pallas_call(
        _loss_kernel,
        out_shape=(
            jax.ShapeDtypeStruct((nsplit * _SUBLANE, _LANE), jnp.float32),
            jax.ShapeDtypeStruct((nsplit * _SUBLANE, _LANE), jnp.float32),
        ),
        grid_spec=pltpu.PrefetchScalarGridSpec(
            num_scalar_prefetch=0,
            grid=(nsplit, tps),
            in_specs=[
                pl.BlockSpec((tile_x, _LANE), lambda s, t: (s * tps + t, 0)),
                pl.BlockSpec((tile_l, _LANE), lambda s, t: (s * tps + t, 0)),
                pl.BlockSpec((tile_p, _LANE), lambda s, t: (s * tps + t, 0)),
            ],
            out_specs=[
                pl.BlockSpec((_SUBLANE, _LANE), lambda s, t: (s, 0)),
                pl.BlockSpec((_SUBLANE, _LANE), lambda s, t: (s, 0)),
            ],
        ),
        compiler_params=pltpu.CompilerParams(
            dimension_semantics=("parallel", "arbitrary")),
        cost_estimate=pl.CostEstimate(
            flops=3 * x_slab.size + l_slab.size + 2 * p_slab.size,
            transcendentals=0,
            bytes_accessed=in_bytes + out_bytes),
    )(x_slab, l_slab, p_slab)

    # Tiny final cross-lane collapse of the (nsplit*8, 128) partials (XLA).
    nll = jnp.sum(nll_parts) - jnp.float32(n * math.log(2.0 * math.pi))
    total = nll + jnp.float32(lambda_1) * jnp.sum(reg_parts)
    return total, nll


def _reference(x, log_det_J, params, lambda_1=0.001):
    iso = -0.5 * (jnp.sum(x.astype(jnp.float32) ** 2, axis=1)
                  - 2.0 * jnp.log(jnp.float32(2.0 * math.pi)))
    nll = -jnp.sum(iso + log_det_J.astype(jnp.float32))
    reg = sum(jnp.sum(p.astype(jnp.float32) ** 2) for p in params)
    return nll + lambda_1 * reg, nll


if __name__ == "__main__":
    key = jax.random.PRNGKey(0)
    k_x, k_ldj, k_w1, k_b1, k_w2, k_b2 = jax.random.split(key, 6)

    # Small shapes consistent with a normalizing-flow latent: batch=8, dim=32.
    N, D = 8, 32
    x = jax.random.normal(k_x, (N, D), dtype=jnp.float32)
    log_det_J = jax.random.normal(k_ldj, (N,), dtype=jnp.float32)

    # Deterministic synthetic "model.parameters()" (shapes of a tiny flow block).
    params = [
        0.1 * jax.random.normal(k_w1, (D, D), dtype=jnp.float32),
        0.1 * jax.random.normal(k_b1, (D,), dtype=jnp.float32),
        0.1 * jax.random.normal(k_w2, (D, D), dtype=jnp.float32),
        0.1 * jax.random.normal(k_b2, (D,), dtype=jnp.float32),
    ]

    # Pack parameters once (setup time), reuse across loss calls.
    param_buf = pack_params(params)

    total, nll = loss_forward(x, log_det_J, param_buf, lambda_1=0.001)
    jax.block_until_ready((total, nll))

    ref_total, ref_nll = _reference(x, log_det_J, params, lambda_1=0.001)
    assert jnp.allclose(total, ref_total, rtol=1e-5, atol=1e-5), (total, ref_total)
    assert jnp.allclose(nll, ref_nll, rtol=1e-5, atol=1e-5), (nll, ref_nll)

    print("KERNEL_OK")
</pallas_src>

<mosaic_0001>
module attributes {stable_mosaic.version = 11 : i64} {
  func.func @_loss_kernel(%arg0: i32, %arg1: i32, %arg2: memref<8x128xf32, #tpu.memory_space<vmem>>, %arg3: memref<8x128xf32, #tpu.memory_space<vmem>>, %arg4: memref<24x128xf32, #tpu.memory_space<vmem>>, %arg5: memref<8x128xf32, #tpu.memory_space<vmem>>, %arg6: memref<8x128xf32, #tpu.memory_space<vmem>>) attributes {dimension_semantics = [#tpu.dimension_semantics<parallel>, #tpu.dimension_semantics<arbitrary>], iteration_bounds = array<i64: 1, 1>, scalar_prefetch = 0 : i64, scratch_operands = 0 : i64, tpu.core_type = #tpu.core_type<tc>, window_params = [{transform_indices = @transform_0, window_bounds = array<i64: 8, 128>}, {transform_indices = @transform_1, window_bounds = array<i64: 8, 128>}, {transform_indices = @transform_2, window_bounds = array<i64: 24, 128>}, {transform_indices = @transform_3, window_bounds = array<i64: 8, 128>}, {transform_indices = @transform_4, window_bounds = array<i64: 8, 128>}]} {
    %c0_i32 = arith.constant 0 : i32
    %0 = arith.cmpi eq, %arg1, %c0_i32 : i32
    %1 = arith.extui %0 : i1 to i32
    %c0_i32_0 = arith.constant 0 : i32
    %2 = arith.cmpi ne, %1, %c0_i32_0 : i32
    scf.if %2 {
      %cst_17 = arith.constant 0.000000e+00 : f32
      %23 = vector.broadcast %cst_17 : f32 to vector<8x128xf32>
      %c0_18 = arith.constant 0 : index
      %c0_19 = arith.constant 0 : index
      %24 = vector.load %arg5[%c0_18, %c0_19] : memref<8x128xf32, #tpu.memory_space<vmem>>, vector<8x128xf32>
      tpu.vector_store %arg5[%c0_18, %c0_19], %23 {strides = array<i32>} : memref<8x128xf32, #tpu.memory_space<vmem>>, vector<8x128xf32>,
      %cst_20 = arith.constant 0.000000e+00 : f32
      %25 = vector.broadcast %cst_20 : f32 to vector<8x128xf32>
      %c0_21 = arith.constant 0 : index
      %c0_22 = arith.constant 0 : index
      %26 = vector.load %arg6[%c0_21, %c0_22] : memref<8x128xf32, #tpu.memory_space<vmem>>, vector<8x128xf32>
      tpu.vector_store %arg6[%c0_21, %c0_22], %25 {strides = array<i32>} : memref<8x128xf32, #tpu.memory_space<vmem>>, vector<8x128xf32>,
    } else {
    }
    %c0 = arith.constant 0 : index
    %c0_1 = arith.constant 0 : index
    %3 = vector.load %arg2[%c0, %c0_1] : memref<8x128xf32, #tpu.memory_space<vmem>>, vector<8x128xf32>
    %c0_2 = arith.constant 0 : index
    %c0_3 = arith.constant 0 : index
    %4 = vector.load %arg3[%c0_2, %c0_3] : memref<8x128xf32, #tpu.memory_space<vmem>>, vector<8x128xf32>
    %c0_4 = arith.constant 0 : index
    %c0_5 = arith.constant 0 : index
    %5 = vector.load %arg4[%c0_4, %c0_5] : memref<24x128xf32, #tpu.memory_space<vmem>>, vector<24x128xf32>
    %c0_6 = arith.constant 0 : index
    %c0_7 = arith.constant 0 : index
    %6 = vector.load %arg5[%c0_6, %c0_7] : memref<8x128xf32, #tpu.memory_space<vmem>>, vector<8x128xf32>
    %7 = arith.mulf %3, %3 : vector<8x128xf32>
    %8 = vector.shape_cast %7 : vector<8x128xf32> to vector<1x8x128xf32>
    %cst = arith.constant dense<0.000000e+00> : vector<8x128xf32>
    %9 = vector.multi_reduction <add>, %8, %cst [0] : vector<1x8x128xf32> to vector<8x128xf32>
    %cst_8 = arith.constant 5.000000e-01 : f32
    %10 = vector.broadcast %cst_8 : f32 to vector<8x128xf32>
    %11 = arith.mulf %10, %9 : vector<8x128xf32>
    %12 = vector.shape_cast %4 : vector<8x128xf32> to vector<1x8x128xf32>
    %cst_9 = arith.constant dense<0.000000e+00> : vector<8x128xf32>
    %13 = vector.multi_reduction <add>, %12, %cst_9 [0] : vector<1x8x128xf32> to vector<8x128xf32>
    %14 = arith.subf %11, %13 : vector<8x128xf32>
    %15 = arith.addf %6, %14 : vector<8x128xf32>
    %c0_10 = arith.constant 0 : index
    %c0_11 = arith.constant 0 : index
    %16 = vector.load %arg5[%c0_10, %c0_11] : memref<8x128xf32, #tpu.memory_space<vmem>>, vector<8x128xf32>
    tpu.vector_store %arg5[%c0_10, %c0_11], %15 {strides = array<i32>} : memref<8x128xf32, #tpu.memory_space<vmem>>, vector<8x128xf32>,
    %c0_12 = arith.constant 0 : index
    %c0_13 = arith.constant 0 : index
    %17 = vector.load %arg6[%c0_12, %c0_13] : memref<8x128xf32, #tpu.memory_space<vmem>>, vector<8x128xf32>
    %18 = arith.mulf %5, %5 : vector<24x128xf32>
    %19 = vector.shape_cast %18 : vector<24x128xf32> to vector<3x8x128xf32>
    %cst_14 = arith.constant dense<0.000000e+00> : vector<8x128xf32>
    %20 = vector.multi_reduction <add>, %19, %cst_14 [0] : vector<3x8x128xf32> to vector<8x128xf32>
    %21 = arith.addf %17, %20 : vector<8x128xf32>
    %c0_15 = arith.constant 0 : index
    %c0_16 = arith.constant 0 : index
    %22 = vector.load %arg6[%c0_15, %c0_16] : memref<8x128xf32, #tpu.memory_space<vmem>>, vector<8x128xf32>
    tpu.vector_store %arg6[%c0_15, %c0_16], %21 {strides = array<i32>} : memref<8x128xf32, #tpu.memory_space<vmem>>, vector<8x128xf32>,
    return
  }
  func.func @transform_0(%arg0: i32, %arg1: i32) -> (i32, i32) {
    %c1_i32 = arith.constant 1 : i32
    %0 = arith.muli %arg0, %c1_i32 : i32
    %1 = arith.addi %0, %arg1 : i32
    %c0_i32 = arith.constant 0 : i32
    %c0_i32_0 = arith.constant 0 : i32
    return %1, %c0_i32 : i32, i32
  }
  func.func @transform_1(%arg0: i32, %arg1: i32) -> (i32, i32) {
    %c1_i32 = arith.constant 1 : i32
    %0 = arith.muli %arg0, %c1_i32 : i32
    %1 = arith.addi %0, %arg1 : i32
    %c0_i32 = arith.constant 0 : i32
    %c0_i32_0 = arith.constant 0 : i32
    return %1, %c0_i32 : i32, i32
  }
  func.func @transform_2(%arg0: i32, %arg1: i32) -> (i32, i32) {
    %c1_i32 = arith.constant 1 : i32
    %0 = arith.muli %arg0, %c1_i32 : i32
    %1 = arith.addi %0, %arg1 : i32
    %c0_i32 = arith.constant 0 : i32
    %c0_i32_0 = arith.constant 0 : i32
    return %1, %c0_i32 : i32, i32
  }
  func.func @transform_3(%arg0: i32, %arg1: i32) -> (i32, i32) {
    %c0_i32 = arith.constant 0 : i32
    %c0_i32_0 = arith.constant 0 : i32
    return %arg0, %c0_i32 : i32, i32
  }
  func.func @transform_4(%arg0: i32, %arg1: i32) -> (i32, i32) {
    %c0_i32 = arith.constant 0 : i32
    %c0_i32_0 = arith.constant 0 : i32
    return %arg0, %c0_i32 : i32, i32
  }
}

</mosaic_0001>

<llo_original>
// kernel: loss_forward.1
$region0: #{loss_forward.1}
  #allocation0 [shape = 'u32[]', space=smem, size = 0x4, offset = 0x4, fixed_abs, tag = 'smem constant byte address 0x4 - core index']
  #allocation1 [shape = 'u32[144,128]{1,0:T(1,128)}', space=vmem, size = 0x12000, scoped, tag = 'internal scratch']
  %s0 = inlined_call_operand.vmem [shape: f32[8,128], index: 0, kind: input, shape index: {}]
  %s1 = inlined_call_operand.vmem [shape: f32[8,128], index: 1, kind: input, shape index: {}]
  %s2 = inlined_call_operand.vmem [shape: f32[24,128], index: 2, kind: input, shape index: {}]
  %s3 = inlined_call_operand.vmem [shape: f32[8,128], index: 3, kind: output, shape index: {0}]
  %s4 = inlined_call_operand.vmem [shape: f32[8,128], index: 4, kind: output, shape index: {1}]
  %5 = xla_tuple %s3, %s4
  %s6 = sld [smem:[#allocation0]]
  $region34: #{loss_forward.1} parent=0
    _
  %s8 = ssub.s32 1, %s6
  %s9 = scalar_select 0, %s8, %s6
  // Predicated region
  $region2: #{loss_forward.1} parent=0 // pred_check
    _
  $region3: #{loss_forward.1} parent=0 // pred_check_branch
    %11 = sbr.rel (0) target = $region5
  $region4: #{loss_forward.1} parent=0 // pred_region
    %s12 = sadd.s32 0, 0
    %p13 = scmp.lt.s32.totalorder %s12, 0
    %s14 = scalar_select %p13, %s12, 0
    %s15 = smul.addr %s14, 8
    %s16 = scalar_lea.vmem %s0, %s15
    %s17 = sadd.s32 0, 0
  $region5: #{loss_forward.1} parent=0 // pred_fallthru
    _
  // Predicated region
  $region6: #{loss_forward.1} parent=0 // pred_check
    _
  $region7: #{loss_forward.1} parent=0 // pred_check_branch
    %19 = sbr.rel (0) target = $region9
  $region8: #{loss_forward.1} parent=0 // pred_region
    %s20 = sadd.s32 0, 0
    %p21 = scmp.lt.s32.totalorder %s20, 0
    %s22 = scalar_select %p21, %s20, 0
    %s23 = smul.addr %s22, 8
    %s24 = scalar_lea.vmem %s1, %s23
    %s25 = sadd.s32 0, 0
  $region9: #{loss_forward.1} parent=0 // pred_fallthru
    _
  // Predicated region
  $region10: #{loss_forward.1} parent=0 // pred_check
    _
  $region11: #{loss_forward.1} parent=0 // pred_check_branch
    %27 = sbr.rel (0) target = $region13
  $region12: #{loss_forward.1} parent=0 // pred_region
    %s28 = sadd.s32 0, 0
    %s29 = smul.u32 3, %s28
    %p30 = scmp.lt.s32.totalorder %s29, 2
    %s31 = scalar_select %p30, %s29, 2
    %s32 = smul.addr %s31, 8
    %s33 = scalar_lea.vmem %s2, %s32
    %s34 = sadd.s32 0, 0
    %s35 = smul.u32 3, %s34
  $region13: #{loss_forward.1} parent=0 // pred_fallthru
    _
  %s36 = sadd.s32 0, 0
  %p37 = scmp.lt.s32.totalorder %s36, 0
  %s38 = scalar_select %p37, %s36, 0
  %s39 = smul.addr %s38, 8
  %s40 = scalar_lea.vmem %s0, %s39
  %s41 = sadd.s32 0, 0
  %p42 = scmp.lt.s32.totalorder %s41, 0
  %s43 = scalar_select %p42, %s41, 0
  %s44 = smul.addr %s43, 8
  %s45 = scalar_lea.vmem %s1, %s44
  %s46 = sadd.s32 0, 0
  %s47 = smul.u32 3, %s46
  %p48 = scmp.lt.s32.totalorder %s47, 2
  %s49 = scalar_select %p48, %s47, 2
  %s50 = smul.addr %s49, 8
  %s51 = scalar_lea.vmem %s2, %s50
  %s52 = sadd.s32 0, 0
  %p53 = scmp.lt.s32.totalorder %s52, 0
  %s54 = scalar_select %p53, %s52, 0
  %s55 = smul.addr %s54, 8
  %s56 = scalar_lea.vmem %s0, %s55
  %s57 = sadd.s32 0, 0
  %s58 = sadd.s32 0, 0
  %p59 = scmp.lt.s32.totalorder %s58, 0
  %s60 = scalar_select %p59, %s58, 0
  %s61 = smul.addr %s60, 8
  %s62 = scalar_lea.vmem %s1, %s61
  %s63 = sadd.s32 0, 0
  %s64 = sadd.s32 0, 0
  %s65 = smul.u32 3, %s64
  %p66 = scmp.lt.s32.totalorder %s65, 2
  %s67 = scalar_select %p66, %s65, 2
  %s68 = smul.addr %s67, 8
  %s69 = scalar_lea.vmem %s2, %s68
  %s70 = sadd.s32 0, 0
  %s71 = smul.u32 3, %s70
  %p72 = scmp.eq.s32.totalorder 0, 0
  // Predicated region
  $region14: #{loss_forward.1} parent=0 // pred_check
    %p73 = pneg %p72
  $region15: #{loss_forward.1} parent=0 // pred_check_branch
    %75 = sbr.rel (%p73) target = $region17
  $region16: #{loss_forward.1} parent=0 // pred_region
    %76 = vst [vmem:[%s3] sm:$0xff] 0.0
    %77 = vst [vmem:[%s4] sm:$0xff] 0.0
  $region17: #{loss_forward.1} parent=0 // pred_fallthru
    _
  %v78 = vld [vmem:[%s56] sm:$0xff]
  %v79 = vld [vmem:[%s62] sm:$0xff]
  %v80 = vld [vmem:[%s69] sm:$0xff]
  %v81 = vld [vmem:[%s69 + $0x8] sm:$0xff]
  %v82 = vld [vmem:[%s69 + $0x10] sm:$0xff]
  %v83 = vld [vmem:[%s3] sm:$0xff]
  %v84 = vmul.f32 %v78, %v78
  %v85 = vadd.f32 %v84, 0.0
  %v86 = vmul.f32 %v85, 0.5
  %v87 = vadd.f32 %v79, 0.0
  %v88 = vsub.f32 %v86, %v87
  %v89 = vadd.f32 %v83, %v88
  %90 = vst [vmem:[%s3] sm:$0xff] %v89
  %v91 = vld [vmem:[%s4] sm:$0xff]
  %v92 = vmul.f32 %v80, %v80
  %v93 = vmul.f32 %v81, %v81
  %v94 = vmul.f32 %v82, %v82
  %v95 = vadd.f32 %v92, %v93
  %v96 = vadd.f32 %v95, %v94
  %v97 = vadd.f32 %v91, %v96
  %98 = vst [vmem:[%s4] sm:$0xff] %v97
  // Predicated region
  $region18: #{loss_forward.1} parent=0 // pred_check
    _
  $region19: #{loss_forward.1} parent=0 // pred_check_branch
    %100 = sbr.rel (0) target = $region21
  $region20: #{loss_forward.1} parent=0 // pred_region
    _
  $region21: #{loss_forward.1} parent=0 // pred_fallthru
    _
  // Predicated region
  $region22: #{loss_forward.1} parent=0 // pred_check
    _
  $region23: #{loss_forward.1} parent=0 // pred_check_branch
    %102 = sbr.rel (0) target = $region25
  $region24: #{loss_forward.1} parent=0 // pred_region
    _
  $region25: #{loss_forward.1} parent=0 // pred_fallthru
    _
  // Predicated region
  $region26: #{loss_forward.1} parent=0 // pred_check
    _
  $region27: #{loss_forward.1} parent=0 // pred_check_branch
    %104 = sbr.rel (0) target = $region29
  $region28: #{loss_forward.1} parent=0 // pred_region
    _
  $region29: #{loss_forward.1} parent=0 // pred_fallthru
    _
  // Predicated region
  $region30: #{loss_forward.1} parent=0 // pred_check
    _
  $region31: #{loss_forward.1} parent=0 // pred_check_branch
    %106 = sbr.rel (0) target = $region33
  $region32: #{loss_forward.1} parent=0 // pred_region
    _
  $region33: #{loss_forward.1} parent=0 // pred_fallthru
    _

</llo_original>
